<compile_context>
chip_gen: v7x
topology: tpu7x:2x2x1
jax: 0.10.0
libtpu: 0.0.40
codegen_flags: <defaults>
</compile_context>

<pallas_src>
import jax
import jax.numpy as jnp
import numpy as np
from jax.experimental import pallas as pl
from jax.experimental.pallas import tpu as pltpu


def _embedding_kernel(idx_ref, tbl_ref, out_ref):
    # idx_ref : (TN, 1)  int32  flattened token/class ids (padded rows hold 0)
    # tbl_ref : (C, E)          full embedding table, resident in VMEM
    # out_ref : (TN, E)         gathered embedding rows
    tn = idx_ref.shape[0]
    c = tbl_ref.shape[0]
    idx = idx_ref[...]                                            # (TN, 1)
    # One-hot selection built on the VPU (2-D iota compare), then a single MXU
    # matmul does the gather: exact, fully vectorized, no per-row DMA.
    iota = jax.lax.broadcasted_iota(jnp.int32, (tn, c), 1)        # (TN, C)
    one_hot = (idx == iota).astype(tbl_ref.dtype)                 # (TN, C)
    out_ref[...] = jnp.dot(one_hot, tbl_ref[...],
                           preferred_element_type=jnp.float32
                           ).astype(out_ref.dtype)


def embedding_forward(indices, table, *, row_tile=1024):
    """Equivalent of Embedding.forward: returns table[indices] with shape (*indices.shape, emb_dim)."""
    num_classes, emb_dim = table.shape
    in_shape = indices.shape
    flat = indices.reshape(-1).astype(jnp.int32)
    n = flat.shape[0]

    # Pad the flattened row count up to a multiple of 8 (sublanes); tile over
    # rows only when the batch exceeds `row_tile` (must be a multiple of 8).
    npad = -(-n // 8) * 8
    if npad > row_tile:
        tn = row_tile
        npad = -(-npad // tn) * tn
    else:
        tn = npad
    flat = jnp.pad(flat, (0, npad - n))            # padded ids -> row 0 (sliced off below)
    idx2 = flat.reshape(npad, 1)

    itemsize = np.dtype(table.dtype).itemsize
    cost = pl.CostEstimate(
        flops=2 * npad * num_classes * emb_dim,
        transcendentals=0,
        bytes_accessed=(idx2.size * 4
                        + num_classes * emb_dim * itemsize
                        + npad * emb_dim * itemsize),
    )

    out = pl.pallas_call(
        _embedding_kernel,
        out_shape=jax.ShapeDtypeStruct((npad, emb_dim), table.dtype),
        grid_spec=pltpu.PrefetchScalarGridSpec(
            num_scalar_prefetch=0,
            grid=(npad // tn,),
            in_specs=[
                pl.BlockSpec((tn, 1), lambda i: (i, 0)),                   # ids tile
                pl.BlockSpec((num_classes, emb_dim), lambda i: (0, 0)),    # whole table
            ],
            out_specs=pl.BlockSpec((tn, emb_dim), lambda i: (i, 0)),
        ),
        compiler_params=pltpu.CompilerParams(
            dimension_semantics=("parallel",)),
        cost_estimate=cost,
    )(idx2, table)

    return out[:n].reshape(*in_shape, emb_dim)


if __name__ == "__main__":
    key = jax.random.PRNGKey(0)
    num_classes, emb_dim = 24, 12        # module defaults: nn.Embedding(24, 12)
    B, S = 2, 8                          # small LongTensor of class ids

    k_idx, k_tbl = jax.random.split(key)
    indices = jax.random.randint(k_idx, (B, S), 0, num_classes, dtype=jnp.int32)
    # nn.Embedding default init is N(0, 1)
    table = jax.random.normal(k_tbl, (num_classes, emb_dim), jnp.float32)

    out = jax.block_until_ready(embedding_forward(indices, table))

    # pure-JAX reference: self.embed(input) == weight[input]
    ref = jnp.take(table, indices, axis=0)
    assert out.shape == (B, S, emb_dim)
    np.testing.assert_allclose(np.asarray(out), np.asarray(ref), rtol=1e-6, atol=1e-6)
    print("KERNEL_OK")
</pallas_src>

<mosaic_0001>
module attributes {stable_mosaic.version = 11 : i64} {
  func.func @_embedding_kernel(%arg0: i32, %arg1: memref<16x1xi32, #tpu.memory_space<vmem>>, %arg2: memref<24x12xf32, #tpu.memory_space<vmem>>, %arg3: memref<16x12xf32, #tpu.memory_space<vmem>>) attributes {dimension_semantics = [#tpu.dimension_semantics<parallel>], iteration_bounds = array<i64: 1>, scalar_prefetch = 0 : i64, scratch_operands = 0 : i64, tpu.core_type = #tpu.core_type<tc>, window_params = [{transform_indices = @transform_0, window_bounds = array<i64: 16, 1>}, {pipeline_mode = #tpu.pipeline_mode<synchronous>, transform_indices = @transform_1, window_bounds = array<i64: 24, 12>}, {transform_indices = @transform_2, window_bounds = array<i64: 16, 12>}]} {
    %c0 = arith.constant 0 : index
    %c0_0 = arith.constant 0 : index
    %0 = vector.load %arg1[%c0, %c0_0] : memref<16x1xi32, #tpu.memory_space<vmem>>, vector<16x1xi32>
    %1 = tpu.iota {dimensions = array<i32: 1>} : vector<16x24xi32>
    %2 = vector.broadcast %0 : vector<16x1xi32> to vector<16x24xi32>
    %3 = arith.cmpi eq, %2, %1 : vector<16x24xi32>
    %4 = arith.extui %3 : vector<16x24xi1> to vector<16x24xi32>
    %5 = arith.sitofp %4 : vector<16x24xi32> to vector<16x24xf32>
    %c0_1 = arith.constant 0 : index
    %c0_2 = arith.constant 0 : index
    %6 = vector.load %arg2[%c0_1, %c0_2] : memref<24x12xf32, #tpu.memory_space<vmem>>, vector<24x12xf32>
    %cst = arith.constant dense<0.000000e+00> : vector<16x12xf32>
    %7 = tpu.matmul %5, %6, %cst {dimension_numbers = #tpu.dot_dimension_numbers<[1], [0], [0], [1], [0, 0, 1, 1], [], []>} : vector<16x24xf32>, vector<24x12xf32>, vector<16x12xf32> -> vector<16x12xf32>
    %c0_3 = arith.constant 0 : index
    %c0_4 = arith.constant 0 : index
    %8 = vector.load %arg3[%c0_3, %c0_4] : memref<16x12xf32, #tpu.memory_space<vmem>>, vector<16x12xf32>
    tpu.vector_store %arg3[%c0_3, %c0_4], %7 {strides = array<i32>} : memref<16x12xf32, #tpu.memory_space<vmem>>, vector<16x12xf32>,
    return
  }
  func.func @transform_0(%arg0: i32) -> (i32, i32) {
    %c0_i32 = arith.constant 0 : i32
    %c0_i32_0 = arith.constant 0 : i32
    return %arg0, %c0_i32 : i32, i32
  }
  func.func @transform_1(%arg0: i32) -> (i32, i32) {
    %c0_i32 = arith.constant 0 : i32
    %c0_i32_0 = arith.constant 0 : i32
    %c0_i32_1 = arith.constant 0 : i32
    return %c0_i32, %c0_i32_0 : i32, i32
  }
  func.func @transform_2(%arg0: i32) -> (i32, i32) {
    %c0_i32 = arith.constant 0 : i32
    %c0_i32_0 = arith.constant 0 : i32
    return %arg0, %c0_i32 : i32, i32
  }
}

</mosaic_0001>

<llo_original>
// kernel: tpu_custom_call.1
$region0: #{tpu_custom_call.1}
  #allocation0 [shape = 'u32[]', space=smem, size = 0x4, offset = 0x4, fixed_abs, tag = 'smem constant byte address 0x4 - core index']
  #allocation1 [shape = 'u32[144,128]{1,0:T(1,128)}', space=vmem, size = 0x12000, scoped, tag = 'internal scratch']
  %s0 = inlined_call_operand.vmem [shape: s32[16,1], index: 0, kind: input, shape index: {}]
  %s1 = inlined_call_operand.vmem [shape: f32[24,12], index: 1, kind: input, shape index: {}]
  %s2 = inlined_call_operand.hbm [shape: f32[16,12], index: 2, kind: output, shape index: {}]
  %s3 = sld [smem:[#allocation0]]
  $region18: #{tpu_custom_call.1} parent=0
    _
  %s5 = ssub.s32 1, %s3
  %s6 = scalar_select 0, %s5, %s3
  $region1: #{tpu_custom_call.1} parent=0
    #allocation2 [shape = 'u8[8192]{0}', space=vmem, size = 0x2000, scoped, tag = 'output window, operand 0, single buffered']
    #allocation3 [shape = 's32[1]{0}', space=sflag, size = 0x4, scoped, tag = 'scoped memory for tpu_custom_call.1']
    %7 = vsyncpa [#allocation3], 0
    // Predicated region
    $region2: #{tpu_custom_call.1} parent=1 // pred_check
      _
    $region3: #{tpu_custom_call.1} parent=1 // pred_check_branch
      %9 = sbr.rel (0) target = $region5
    $region4: #{tpu_custom_call.1} parent=1 // pred_region
      _
    $region5: #{tpu_custom_call.1} parent=1 // pred_fallthru
      _
    // Predicated region
    $region6: #{tpu_custom_call.1} parent=1 // pred_check
      _
    $region7: #{tpu_custom_call.1} parent=1 // pred_check_branch
      %11 = sbr.rel (0) target = $region9
    $region8: #{tpu_custom_call.1} parent=1 // pred_region
      _
    $region9: #{tpu_custom_call.1} parent=1 // pred_fallthru
      _
    %v12 = vld [vmem:[%s0] sm:$0xff]
    %v13 = vld [vmem:[%s0 + $0x8] sm:$0xff]
    %v14 = vlaneseq
    %v15 = vand.u32 %v14, 127
    %16 = vset.pattern.permute.xlu0 0
    %17 = vperm.xlu0 %16, %v12
    %v18 = vpop.permute.xlu0 %17
    %19 = vset.pattern.permute.xlu0 0
    %20 = vperm.xlu0 %19, %v13
    %v21 = vpop.permute.xlu0 %20
    %vm22 = vcmp.eq.s32.totalorder %v18, %v15
    %vm23 = vcmp.eq.s32.totalorder %v21, %v15
    %v24 = vsel %vm22, 1, 0
    %v25 = vsel %vm23, 1, 0
    %v26 = vcvt.s32.f32 %v24
    %v27 = vcvt.s32.f32 %v25
    %v28 = vld [vmem:[%s1] sm:$0xff]
    %v29 = vld [vmem:[%s1 + $0x8] sm:$0xff]
    %v30 = vld [vmem:[%s1 + $0x10] sm:$0xff]
    %vm31 = vcmask 195584
    %v33 = vsel %vm31, %v26, 0
    %v36 = vsel %vm31, %v27, 0
    %38 = vmatprep.subr.mxu0 0.0
    %39 = vmatpush1.msra.mxu0 %v28
    %40 = vmatprep.subr.mxu0 0.0
    %41 = vmatpush1.msra.mxu0 %v29
    %42 = vmatprep.subr.mxu0 0.0
    %43 = vmatpush1.msra.mxu0 %v30
    %44 = vmatprep.subr.mxu0 0.0
    %45 = vmatpush1.msra.mxu0 0.0
    %46 = vmatprep.subr.mxu0 0.0
    %47 = vmatpush1.msra.mxu0 0.0
    %48 = vmatprep.subr.mxu0 0.0
    %49 = vmatpush1.msra.mxu0 0.0
    %50 = vmatprep.subr.mxu0 0.0
    %51 = vmatpush1.msra.mxu0 0.0
    %52 = vmatprep.subr.mxu0 0.0
    %53 = vmatpush1.msra.mxu0 0.0
    %54 = vmatprep.subr.mxu0 0.0
    %55 = vmatpush1.msra.mxu0 0.0
    %56 = vmatprep.subr.mxu0 0.0
    %57 = vmatpush1.msra.mxu0 0.0
    %58 = vmatprep.subr.mxu0 0.0
    %59 = vmatpush1.msra.mxu0 0.0
    %60 = vmatprep.subr.mxu0 0.0
    %61 = vmatpush1.msra.mxu0 0.0
    %62 = vmatprep.subr.mxu0 0.0
    %63 = vmatpush1.msra.mxu0 0.0
    %64 = vmatprep.subr.mxu0 0.0
    %65 = vmatpush1.msra.mxu0 0.0
    %66 = vmatprep.subr.mxu0 0.0
    %67 = vmatpush1.msra.mxu0 0.0
    %68 = vmatprep.subr.mxu0 0.0
    %69 = vmatpush1.msra.mxu0 0.0
    %70 = vmatprep.subr.mxu0 0.0
    %71 = vmatpush1.msra.mxu0 0.0
    %72 = vmatprep.subr.mxu0 0.0
    %73 = vmatpush1.msra.mxu0 0.0
    %74 = vmatprep.subr.mxu0 0.0
    %75 = vmatpush1.msra.mxu0 0.0
    %76 = vmatprep.subr.mxu0 0.0
    %77 = vmatpush1.msra.mxu0 0.0
    %78 = vmatprep.subr.mxu0 0.0
    %79 = vmatpush1.msra.mxu0 0.0
    %80 = vmatprep.subr.mxu0 0.0
    %81 = vmatpush1.msra.mxu0 0.0
    %82 = vmatprep.subr.mxu0 0.0
    %83 = vmatpush1.msra.mxu0 0.0
    %84 = vmatprep.subr.mxu0 0.0
    %85 = vmatpush1.msra.mxu0 0.0
    %86 = vmatprep.subr.mxu0 0.0
    %87 = vmatpush1.msra.mxu0 0.0
    %88 = vmatprep.subr.mxu0 0.0
    %89 = vmatpush1.msra.mxu0 0.0
    %90 = vmatprep.subr.mxu0 0.0
    %91 = vmatpush1.msra.mxu0 0.0
    %92 = vmatprep.subr.mxu0 0.0
    %93 = vmatpush1.msra.mxu0 0.0
    %94 = vmatprep.subr.mxu0 0.0
    %95 = vmatpush1.msra.mxu0 0.0
    %96 = vmatprep.subr.mxu0 0.0
    %97 = vmatpush1.msra.mxu0 0.0
    %98 = vmatprep.subr.mxu0 0.0
    %99 = vmatpush1.msra.mxu0 0.0
    %100 = vmatprep.subr.mxu0 0.0
    %101 = vmatpush1.msra.mxu0 0.0
    %102 = vmatprep.mubr.f32.mxu0 0.0
    %103 = vmatmul.mubr.f32.gmra.mrb[0].mxu0 %v33
    %v104 = vpop.f32.mrb[0].mxu0
    %v105 = vadd.f32 0.0, %v104
    %v106 = vpop.f32.mrb[0].mxu0
    %107 = vmatprep.mubr.f32.mxu0 0.0
    %108 = vmatmul.mubr.f32.gmra.mrb[0].mxu0 %v36
    %v109 = vpop.f32.mrb[0].mxu0
    %v110 = vadd.f32 0.0, %v109
    %v111 = vpop.f32.mrb[0].mxu0
    %112 = vdwg.mxu0
    %vm113 = vcmask 97280
    %114 = vst.msk [vmem:[#allocation2] sm:$0xff] %vm113, %v105
    %115 = vst.msk [vmem:[#allocation2 + $0x8] sm:$0xff] %vm113, %v110
    // Predicated region
    $region10: #{tpu_custom_call.1} parent=1 // pred_check
      _
    $region11: #{tpu_custom_call.1} parent=1 // pred_check_branch
      %117 = sbr.rel (0) target = $region13
    $region12: #{tpu_custom_call.1} parent=1 // pred_region
      %s119 = ssub.s32 256, 256
      %120 = vsyncadd [#allocation3], %s119
      %s121 = sshll.u32 [#allocation2], 4
      %s122 = int_to_ptr.vmem [resolvable:$true] %s121
      %127 = dma.vmem_to_hbm [thread:$0]  %s122, 256, %s2, [#allocation3], 128, 128, 8
    $region13: #{tpu_custom_call.1} parent=1 // pred_fallthru
      _
    // Predicated region
    $region14: #{tpu_custom_call.1} parent=1 // pred_check
      _
    $region15: #{tpu_custom_call.1} parent=1 // pred_check_branch
      %129 = sbr.rel (0) target = $region17
    $region16: #{tpu_custom_call.1} parent=1 // pred_region
      %130 = dma.done [#allocation3], 256
    $region17: #{tpu_custom_call.1} parent=1 // pred_fallthru
      _
    %131 = vsyncpa [#allocation3], 1

</llo_original>
